<compile_context>
chip_gen: v7x
topology: tpu7x:2x2x1
jax: 0.10.0
libtpu: 0.0.40
codegen_flags: <defaults>
</compile_context>

<pallas_src>
import functools

import numpy as np
import jax
import jax.numpy as jnp
from jax.experimental import pallas as pl
from jax.experimental.pallas import tpu as pltpu


def _ceil_to(x, m):
    return ((x + m - 1) // m) * m


# ---------------------------------------------------------------------------
# Pallas kernel: bilinear grid_sample for one (camera, P-tile) block.
# ---------------------------------------------------------------------------
def _grid_sample_kernel(fH, fW, fW_pad, tp_chunk, coords_ref, feat_ref, out_ref):
    # coords_ref: (2, TP)           normalized coords, row 0 = x, row 1 = y (f32)
    # feat_ref  : (C, fH*fW_pad)    channels-first, row-major (h, w_pad) flattened
    # out_ref   : (C, TP)
    feat = feat_ref[...]
    cdt = feat.dtype                              # compute dtype (bf16 or f32)
    TP = coords_ref.shape[1]
    num_chunks = TP // tp_chunk
    zero = jnp.zeros((), cdt)

    # Static (unrolled) sub-chunk loop: keeps the (fH*fW_pad, chunk) weight
    # temporaries bounded while the pipelined DMA/store block stays at TP.
    for c in range(num_chunks):
        s = c * tp_chunk                                       # static, 128-aligned
        coords = coords_ref[:, s:s + tp_chunk]                 # (2, chunk)
        gx = coords[0:1, :]                                    # (1, chunk)
        gy = coords[1:2, :]

        # align_corners=True un-normalization (in f32 for index precision).
        ix = (gx + 1.0) * (0.5 * (fW - 1))
        iy = (gy + 1.0) * (0.5 * (fH - 1))
        x0f = jnp.floor(ix)
        y0f = jnp.floor(iy)
        wx1 = ix - x0f
        wx0 = 1.0 - wx1
        wy1 = iy - y0f
        wy0 = 1.0 - wy1
        x0 = x0f.astype(jnp.int32)
        y0 = y0f.astype(jnp.int32)
        x1 = x0 + 1
        y1 = y0 + 1

        # Separable one-hot weight matrices.  Out-of-bounds corners either
        # match nothing or hit a zero-padded feature column -> zeros padding.
        w_iota = jax.lax.broadcasted_iota(jnp.int32, (fW_pad, tp_chunk), 0)
        h_iota = jax.lax.broadcasted_iota(jnp.int32, (fH, tp_chunk), 0)
        wx_mat = (jnp.where(w_iota == x0, wx0.astype(cdt), zero)
                  + jnp.where(w_iota == x1, wx1.astype(cdt), zero))
        wy_mat = (jnp.where(h_iota == y0, wy0.astype(cdt), zero)
                  + jnp.where(h_iota == y1, wy1.astype(cdt), zero))

        # (fH*fW_pad, chunk) weights via one broadcasted outer product; fW_pad
        # is a sublane multiple so the reshape is layout-preserving.
        w_mat = (wy_mat[:, None, :] * wx_mat[None, :, :]).reshape(fH * fW_pad,
                                                                  tp_chunk)

        # MXU contraction with f32 accumulation; lane-dense (C, chunk) store.
        out = jnp.dot(feat, w_mat, preferred_element_type=jnp.float32)
        out_ref[:, s:s + tp_chunk] = out.astype(out_ref.dtype)


# ---------------------------------------------------------------------------
# Coordinate grid construction (mirrors prepare_coordinates_3d)
# ---------------------------------------------------------------------------
def make_coordinates_3d(point_cloud_range, voxel_size):
    pc = np.array(point_cloud_range, dtype=np.float64)
    vs = np.array(voxel_size, dtype=np.float64)
    grid_size = np.round((pc[3:6] - pc[0:3]) / vs).astype(np.int64)
    GX, GY, GZ = grid_size.tolist()
    X_MIN, Y_MIN, Z_MIN = pc[:3]
    X_MAX, Y_MAX, Z_MAX = pc[3:6]
    VX, VY, VZ = vs
    zs = jnp.linspace(Z_MIN + VZ / 2.0, Z_MAX - VZ / 2.0, GZ, dtype=jnp.float32)
    ys = jnp.linspace(Y_MIN + VY / 2.0, Y_MAX - VY / 2.0, GY, dtype=jnp.float32)
    xs = jnp.linspace(X_MIN + VX / 2.0, X_MAX - VX / 2.0, GX, dtype=jnp.float32)
    zz, yy, xx = jnp.meshgrid(zs, ys, xs, indexing="ij")      # torch default 'ij'
    return jnp.stack([xx, yy, zz], axis=-1)                   # (bev_D, bev_H, bev_W, 3)


# ---------------------------------------------------------------------------
# Plain-JAX glue: project voxel centers into image plane (mirrors forward()),
# returning normalized coords CHANNEL-FIRST: (B, N, 2, D, H, W).
# ---------------------------------------------------------------------------
def project_coords(coords3d, sensor2egos, ego2sensors, intrins,
                   post_rots, post_trans, bda, img_H, img_W):
    B, N = intrins.shape[:2]
    D, H, W, _ = coords3d.shape
    c = jnp.broadcast_to(coords3d, (B, D, H, W, 3))

    c3d = jnp.einsum("bij,bdhwj->bdhwi", bda, c)                              # bda rotation
    c3d = c3d[:, None] - sensor2egos[:, :, :3, 3][:, :, None, None, None, :]  # (B,N,D,H,W,3)
    c3d = jnp.einsum("bnij,bndhwj->bndhwi", ego2sensors[:, :, :3, :3], c3d)
    c3d_img = jnp.einsum("bnij,bndhwj->bndhwi", intrins, c3d)

    # NOTE: no depth clamp on the division and the mask is on the projected y
    # pixel sign -- this mirrors the PyTorch reference code exactly.
    x_pix = c3d_img[..., 0] / c3d_img[..., 2]                  # (B,N,D,H,W)
    y_pix = c3d_img[..., 1] / c3d_img[..., 2]
    kept_not = y_pix < 0
    x_pix = jnp.where(kept_not, jnp.float32(-10000.0), x_pix)
    y_pix = jnp.where(kept_not, jnp.float32(-10000.0), y_pix)
    x_pix = jnp.where(jnp.abs(x_pix) > 10000.0, jnp.float32(-1000.0), x_pix)
    y_pix = jnp.where(jnp.abs(y_pix) > 10000.0, jnp.float32(-1000.0), y_pix)

    pr = post_rots[:, :, :2, :2]
    u = (pr[:, :, 0, 0][..., None, None, None] * x_pix
         + pr[:, :, 0, 1][..., None, None, None] * y_pix
         + post_trans[:, :, 0][..., None, None, None])
    v = (pr[:, :, 1, 0][..., None, None, None] * x_pix
         + pr[:, :, 1, 1][..., None, None, None] * y_pix
         + post_trans[:, :, 1][..., None, None, None])

    u = u / (img_W - 1.0) * 2.0 - 1.0
    v = v / (img_H - 1.0) * 2.0 - 1.0
    return jnp.stack([u, v], axis=2)                           # (B, N, 2, D, H, W)


# ---------------------------------------------------------------------------
# Forward wrapper (== GridSample.forward)
# ---------------------------------------------------------------------------
def grid_sample_forward(features, sensor2egos, ego2sensors, ego2globals,
                        intrins, post_rots, post_trans, bda, img_shape, coords3d,
                        p_tile=2048, p_chunk=512, use_bf16=True, out_dtype=None):
    del ego2globals  # unused by the reference forward
    img_H, img_W = img_shape
    B, N, C, fH, fW = features.shape
    D, H, W, _ = coords3d.shape
    P = D * H * W
    BN = B * N
    out_dtype = features.dtype if out_dtype is None else out_dtype
    compute_dtype = jnp.bfloat16 if use_bf16 else jnp.float32

    # Channel-first normalized coords -> reshapes directly, no HBM transpose.
    norm = project_coords(coords3d, sensor2egos, ego2sensors, intrins,
                          post_rots, post_trans, bda, img_H, img_W)
    grid2d = norm.reshape(BN, 2, P).astype(jnp.float32)        # (BN, 2, P)

    # P-tiling: big grid-step block (amortize per-step overhead), chunked
    # internally; everything lane-aligned (multiples of 128).
    p_tile = _ceil_to(max(p_tile, 128), 128)
    p_chunk = _ceil_to(max(p_chunk, 128), 128)
    TP = min(p_tile, _ceil_to(P, 128))
    tp_chunk = min(p_chunk, TP)
    TP = _ceil_to(TP, tp_chunk)                                # tp_chunk | TP
    P_pad = _ceil_to(P, TP)
    if P_pad != P:
        # Far-OOB padding coords -> sampled value 0; padded lanes sliced off.
        pad = jnp.full((BN, 2, P_pad - P), -2.0, jnp.float32)
        grid2d = jnp.concatenate([grid2d, pad], axis=-1)

    # Pad fW to a sublane multiple (8 f32 / 16 bf16) with zero columns so the
    # in-kernel (fH, fW_pad, chunk) -> (fH*fW_pad, chunk) reshape is free.
    sub = 16 if compute_dtype == jnp.bfloat16 else 8
    fW_pad = _ceil_to(fW, sub)
    feats = features
    if fW_pad != fW:
        feats = jnp.pad(feats, ((0, 0), (0, 0), (0, 0), (0, 0), (0, fW_pad - fW)))
    HW_pad = fH * fW_pad

    # NCHW flattens directly into the channels-first slab -- no HBM transpose.
    feat = feats.reshape(BN, C, HW_pad).astype(compute_dtype)

    out = pl.pallas_call(
        functools.partial(_grid_sample_kernel, fH, fW, fW_pad, tp_chunk),
        out_shape=jax.ShapeDtypeStruct((BN, C, P_pad), out_dtype),
        grid=(BN, P_pad // TP),
        in_specs=[
            # coords: new P-tile per inner step
            pl.BlockSpec((None, 2, TP), lambda i, p: (i, 0, p)),
            # features: tiny block, re-fetched per P-tile (both axes parallel)
            pl.BlockSpec((None, C, HW_pad), lambda i, p: (i, 0, 0)),
        ],
        out_specs=pl.BlockSpec((None, C, TP), lambda i, p: (i, 0, p)),
        compiler_params=pltpu.CompilerParams(
            # Both axes parallel: cameras AND P-tiles shard across v7x's two
            # TensorCores (small/odd BN alone load-balances poorly).
            dimension_semantics=("parallel", "parallel"),
            # Generous but v7x-safe (<= ~48 MiB of 64 MiB physical) VMEM budget.
            vmem_limit_bytes=48 * 1024 * 1024,
        ),
    )(grid2d, feat)

    out = out[:, :, :P]                                        # drop P padding
    voxels = out.reshape(B, N, C, D, H, W)                     # no transpose needed
    return voxels                                              # (B, N, C, D, H, W)


# ---------------------------------------------------------------------------
# Pure-JAX reference grid_sample (bilinear, zeros padding, align_corners=True)
# ---------------------------------------------------------------------------
def grid_sample_ref(feat_nchw, grid, fH, fW):
    gx, gy = grid[..., 0], grid[..., 1]
    ix = (gx + 1.0) * 0.5 * (fW - 1)
    iy = (gy + 1.0) * 0.5 * (fH - 1)
    x0 = jnp.floor(ix); x1 = x0 + 1.0
    y0 = jnp.floor(iy); y1 = y0 + 1.0
    wx1 = ix - x0; wx0 = 1.0 - wx1
    wy1 = iy - y0; wy0 = 1.0 - wy1
    ff = feat_nchw.reshape(feat_nchw.shape[0], feat_nchw.shape[1], fH * fW)

    def sample(xi, yi, w):
        m = ((xi >= 0) & (xi <= fW - 1) & (yi >= 0) & (yi <= fH - 1)).astype(ff.dtype)
        xc = jnp.clip(xi, 0, fW - 1).astype(jnp.int32)
        yc = jnp.clip(yi, 0, fH - 1).astype(jnp.int32)
        idx = yc * fW + xc                                    # (BN, P)
        vals = jnp.take_along_axis(ff, idx[:, None, :], axis=2)   # (BN, C, P)
        return vals * (w * m)[:, None, :]

    return (sample(x0, y0, wx0 * wy0) + sample(x1, y0, wx1 * wy0) +
            sample(x0, y1, wx0 * wy1) + sample(x1, y1, wx1 * wy1))   # (BN, C, P)


if __name__ == "__main__":
    key = jax.random.PRNGKey(0)
    ks = jax.random.split(key, 8)

    B, N, C = 2, 2, 4
    fH, fW = 16, 16
    img_H, img_W = 64, 64
    point_cloud_range = [-4.0, -4.0, -1.0, 4.0, 4.0, 1.0]
    voxel_size = [1.0, 1.0, 0.5]

    coords3d = make_coordinates_3d(point_cloud_range, voxel_size)   # (4, 8, 8, 3)

    features = jax.random.normal(ks[0], (B, N, C, fH, fW), jnp.float32)

    eye3 = jnp.eye(3, dtype=jnp.float32)
    R = eye3 + 0.05 * jax.random.normal(ks[1], (B, N, 3, 3), jnp.float32)
    t = 0.5 * jax.random.normal(ks[2], (B, N, 3), jnp.float32)
    sensor2egos = jnp.zeros((B, N, 4, 4), jnp.float32)
    sensor2egos = sensor2egos.at[:, :, :3, :3].set(R)
    sensor2egos = sensor2egos.at[:, :, :3, 3].set(t)
    sensor2egos = sensor2egos.at[:, :, 3, 3].set(1.0)
    ego2sensors = jnp.zeros((B, N, 4, 4), jnp.float32)
    ego2sensors = ego2sensors.at[:, :, :3, :3].set(jnp.swapaxes(R, -1, -2))
    ego2sensors = ego2sensors.at[:, :, 3, 3].set(1.0)
    ego2globals = jnp.broadcast_to(jnp.eye(4, dtype=jnp.float32), (B, N, 4, 4))

    intrin = jnp.array([[img_W / 2.0, 0.0, img_W / 2.0],
                        [0.0, img_H / 2.0, img_H / 2.0],
                        [0.0, 0.0, 1.0]], jnp.float32)
    intrins = jnp.broadcast_to(intrin, (B, N, 3, 3))
    post_rots = jnp.broadcast_to(eye3, (B, N, 3, 3)) + \
        0.01 * jax.random.normal(ks[3], (B, N, 3, 3), jnp.float32)
    post_trans = 2.0 * jax.random.normal(ks[4], (B, N, 3), jnp.float32)
    bda = jnp.broadcast_to(eye3, (B, 3, 3)) + \
        0.01 * jax.random.normal(ks[5], (B, 3, 3), jnp.float32)

    D, H, W, _ = coords3d.shape
    P = D * H * W

    # pure-JAX reference (f32)
    norm_cf = project_coords(coords3d, sensor2egos, ego2sensors, intrins,
                             post_rots, post_trans, bda, img_H, img_W)
    grid_ref = jnp.transpose(norm_cf.reshape(B * N, 2, P), (0, 2, 1))
    ref = grid_sample_ref(features.reshape(B * N, C, fH, fW), grid_ref, fH, fW)
    ref = np.asarray(ref.reshape(B, N, C, D, H, W))

    # 1) exact-math f32 kernel path (tight tolerance)
    voxels_f32 = grid_sample_forward(features, sensor2egos, ego2sensors, ego2globals,
                                     intrins, post_rots, post_trans, bda,
                                     (img_H, img_W), coords3d, use_bf16=False)
    voxels_f32 = jax.block_until_ready(voxels_f32)
    assert voxels_f32.shape == (B, N, C, D, H, W)
    np.testing.assert_allclose(np.asarray(voxels_f32), ref, rtol=1e-4, atol=1e-4)

    # 2) default fast bf16 MXU path (looser tolerance: bf16 feat + weights)
    voxels_bf16 = grid_sample_forward(features, sensor2egos, ego2sensors, ego2globals,
                                      intrins, post_rots, post_trans, bda,
                                      (img_H, img_W), coords3d, use_bf16=True)
    voxels_bf16 = jax.block_until_ready(voxels_bf16)
    assert voxels_bf16.shape == (B, N, C, D, H, W)
    np.testing.assert_allclose(np.asarray(voxels_bf16), ref, rtol=5e-2, atol=5e-2)

    print("KERNEL_OK")
</pallas_src>

<mosaic_0001>
module attributes {stable_mosaic.version = 11 : i64} {
  func.func @_grid_sample_kernel(%arg0: i32, %arg1: i32, %arg2: memref<1x2x256xf32, #tpu.memory_space<vmem>>, %arg3: memref<1x4x256xf32, #tpu.memory_space<vmem>>, %arg4: memref<1x4x256xf32, #tpu.memory_space<vmem>>) attributes {dimension_semantics = [#tpu.dimension_semantics<parallel>, #tpu.dimension_semantics<parallel>], iteration_bounds = array<i64: 4, 1>, scalar_prefetch = 0 : i64, scratch_operands = 0 : i64, tpu.core_type = #tpu.core_type<tc>, window_params = [{transform_indices = @transform_0, window_bounds = array<i64: 1, 2, 256>}, {transform_indices = @transform_1, window_bounds = array<i64: 1, 4, 256>}, {transform_indices = @transform_2, window_bounds = array<i64: 1, 4, 256>}]} {
    %c0 = arith.constant 0 : index
    %c0_0 = arith.constant 0 : index
    %c0_1 = arith.constant 0 : index
    %0 = vector.load %arg3[%c0, %c0_0, %c0_1] : memref<1x4x256xf32, #tpu.memory_space<vmem>>, vector<1x4x256xf32>
    %1 = vector.shape_cast %0 : vector<1x4x256xf32> to vector<4x256xf32>
    %c0_2 = arith.constant 0 : index
    %c0_3 = arith.constant 0 : index
    %c0_4 = arith.constant 0 : index
    %2 = vector.load %arg2[%c0_2, %c0_3, %c0_4] : memref<1x2x256xf32, #tpu.memory_space<vmem>>, vector<1x2x256xf32>
    %3 = vector.shape_cast %2 : vector<1x2x256xf32> to vector<2x256xf32>
    %4 = vector.extract_strided_slice %3 {offsets = [0, 0], sizes = [1, 256], strides = [1, 1]} : vector<2x256xf32> to vector<1x256xf32>
    %5 = vector.extract_strided_slice %3 {offsets = [1, 0], sizes = [1, 256], strides = [1, 1]} : vector<2x256xf32> to vector<1x256xf32>
    %cst = arith.constant 1.000000e+00 : f32
    %6 = vector.broadcast %cst : f32 to vector<1x256xf32>
    %7 = arith.addf %4, %6 : vector<1x256xf32>
    %cst_5 = arith.constant 7.500000e+00 : f32
    %8 = vector.broadcast %cst_5 : f32 to vector<1x256xf32>
    %9 = arith.mulf %7, %8 : vector<1x256xf32>
    %cst_6 = arith.constant 1.000000e+00 : f32
    %10 = vector.broadcast %cst_6 : f32 to vector<1x256xf32>
    %11 = arith.addf %5, %10 : vector<1x256xf32>
    %cst_7 = arith.constant 7.500000e+00 : f32
    %12 = vector.broadcast %cst_7 : f32 to vector<1x256xf32>
    %13 = arith.mulf %11, %12 : vector<1x256xf32>
    %14 = math.floor %9 : vector<1x256xf32>
    %15 = math.floor %13 : vector<1x256xf32>
    %16 = arith.subf %9, %14 : vector<1x256xf32>
    %cst_8 = arith.constant 1.000000e+00 : f32
    %17 = vector.broadcast %cst_8 : f32 to vector<1x256xf32>
    %18 = arith.subf %17, %16 : vector<1x256xf32>
    %19 = arith.subf %13, %15 : vector<1x256xf32>
    %cst_9 = arith.constant 1.000000e+00 : f32
    %20 = vector.broadcast %cst_9 : f32 to vector<1x256xf32>
    %21 = arith.subf %20, %19 : vector<1x256xf32>
    %22 = arith.fptosi %14 : vector<1x256xf32> to vector<1x256xi32>
    %23 = arith.fptosi %15 : vector<1x256xf32> to vector<1x256xi32>
    %c1_i32 = arith.constant 1 : i32
    %24 = vector.broadcast %c1_i32 : i32 to vector<1x256xi32>
    %25 = arith.addi %22, %24 : vector<1x256xi32>
    %c1_i32_10 = arith.constant 1 : i32
    %26 = vector.broadcast %c1_i32_10 : i32 to vector<1x256xi32>
    %27 = arith.addi %23, %26 : vector<1x256xi32>
    %28 = tpu.iota {dimensions = array<i32: 0>} : vector<16x256xi32>
    %29 = tpu.iota {dimensions = array<i32: 0>} : vector<16x256xi32>
    %30 = vector.broadcast %22 : vector<1x256xi32> to vector<16x256xi32>
    %31 = arith.cmpi eq, %28, %30 : vector<16x256xi32>
    %cst_11 = arith.constant 0.000000e+00 : f32
    %32 = vector.shape_cast %18 : vector<1x256xf32> to vector<1x256xf32>
    %33 = vector.broadcast %32 : vector<1x256xf32> to vector<16x256xf32>
    %34 = vector.broadcast %cst_11 : f32 to vector<16x256xf32>
    %35 = arith.select %31, %33, %34 : vector<16x256xi1>, vector<16x256xf32>
    %36 = vector.broadcast %25 : vector<1x256xi32> to vector<16x256xi32>
    %37 = arith.cmpi eq, %28, %36 : vector<16x256xi32>
    %cst_12 = arith.constant 0.000000e+00 : f32
    %38 = vector.shape_cast %16 : vector<1x256xf32> to vector<1x256xf32>
    %39 = vector.broadcast %38 : vector<1x256xf32> to vector<16x256xf32>
    %40 = vector.broadcast %cst_12 : f32 to vector<16x256xf32>
    %41 = arith.select %37, %39, %40 : vector<16x256xi1>, vector<16x256xf32>
    %42 = arith.addf %35, %41 : vector<16x256xf32>
    %43 = vector.broadcast %23 : vector<1x256xi32> to vector<16x256xi32>
    %44 = arith.cmpi eq, %29, %43 : vector<16x256xi32>
    %cst_13 = arith.constant 0.000000e+00 : f32
    %45 = vector.shape_cast %21 : vector<1x256xf32> to vector<1x256xf32>
    %46 = vector.broadcast %45 : vector<1x256xf32> to vector<16x256xf32>
    %47 = vector.broadcast %cst_13 : f32 to vector<16x256xf32>
    %48 = arith.select %44, %46, %47 : vector<16x256xi1>, vector<16x256xf32>
    %49 = vector.broadcast %27 : vector<1x256xi32> to vector<16x256xi32>
    %50 = arith.cmpi eq, %29, %49 : vector<16x256xi32>
    %cst_14 = arith.constant 0.000000e+00 : f32
    %51 = vector.shape_cast %19 : vector<1x256xf32> to vector<1x256xf32>
    %52 = vector.broadcast %51 : vector<1x256xf32> to vector<16x256xf32>
    %53 = vector.broadcast %cst_14 : f32 to vector<16x256xf32>
    %54 = arith.select %50, %52, %53 : vector<16x256xi1>, vector<16x256xf32>
    %55 = arith.addf %48, %54 : vector<16x256xf32>
    %56 = vector.shape_cast %55 : vector<16x256xf32> to vector<16x1x256xf32>
    %57 = vector.shape_cast %42 : vector<16x256xf32> to vector<1x16x256xf32>
    %58 = vector.broadcast %56 : vector<16x1x256xf32> to vector<16x16x256xf32>
    %59 = vector.broadcast %57 : vector<1x16x256xf32> to vector<16x16x256xf32>
    %60 = arith.mulf %58, %59 : vector<16x16x256xf32>
    %61 = vector.shape_cast %60 : vector<16x16x256xf32> to vector<256x256xf32>
    %cst_15 = arith.constant dense<0.000000e+00> : vector<4x256xf32>
    %62 = tpu.matmul %1, %61, %cst_15 {dimension_numbers = #tpu.dot_dimension_numbers<[1], [0], [0], [1], [0, 0, 1, 1], [], []>} : vector<4x256xf32>, vector<256x256xf32>, vector<4x256xf32> -> vector<4x256xf32>
    %c0_16 = arith.constant 0 : index
    %c0_17 = arith.constant 0 : index
    %c0_18 = arith.constant 0 : index
    %63 = vector.load %arg4[%c0_16, %c0_17, %c0_18] : memref<1x4x256xf32, #tpu.memory_space<vmem>>, vector<1x4x256xf32>
    %64 = vector.shape_cast %63 : vector<1x4x256xf32> to vector<4x256xf32>
    %65 = vector.shape_cast %62 : vector<4x256xf32> to vector<1x4x256xf32>
    tpu.vector_store %arg4[%c0_16, %c0_17, %c0_18], %65 {strides = array<i32>} : memref<1x4x256xf32, #tpu.memory_space<vmem>>, vector<1x4x256xf32>,
    return
  }
  func.func @transform_0(%arg0: i32, %arg1: i32) -> (i32, i32, i32) {
    %c0_i32 = arith.constant 0 : i32
    %c0_i32_0 = arith.constant 0 : i32
    return %arg0, %c0_i32, %arg1 : i32, i32, i32
  }
  func.func @transform_1(%arg0: i32, %arg1: i32) -> (i32, i32, i32) {
    %c0_i32 = arith.constant 0 : i32
    %c0_i32_0 = arith.constant 0 : i32
    %c0_i32_1 = arith.constant 0 : i32
    return %arg0, %c0_i32, %c0_i32_0 : i32, i32, i32
  }
  func.func @transform_2(%arg0: i32, %arg1: i32) -> (i32, i32, i32) {
    %c0_i32 = arith.constant 0 : i32
    %c0_i32_0 = arith.constant 0 : i32
    return %arg0, %c0_i32, %arg1 : i32, i32, i32
  }
}

</mosaic_0001>

<llo_original>
// kernel: tpu_custom_call.1
$region0: #{tpu_custom_call.1}
  #allocation0 [shape = 'u32[]', space=smem, size = 0x4, offset = 0x4, fixed_abs, tag = 'smem constant byte address 0x4 - core index']
  #allocation1 [shape = 'u32[144,128]{1,0:T(1,128)}', space=vmem, size = 0x12000, scoped, tag = 'internal scratch']
  %s0 = inlined_call_operand.hbm [shape: f32[4,2,256], index: 0, kind: input, shape index: {}]
  %s1 = inlined_call_operand.hbm [shape: f32[4,4,256], index: 1, kind: input, shape index: {}]
  %s2 = inlined_call_operand.hbm [shape: f32[4,4,256], index: 2, kind: output, shape index: {}]
  %s3 = sld [smem:[#allocation0]]
  $region49: #{tpu_custom_call.1} parent=0
    _
  %s5 = ssub.s32 1, %s3
  %s6 = scalar_select 0, %s5, %s3
  $region1: #{tpu_custom_call.1} parent=0
    #allocation2 [shape = 'u8[4096]{0}', space=vmem, size = 0x1000, scoped, tag = 'input window, operand 0']
    #allocation3 [shape = 's32[2]{0}', space=sflag, size = 0x8, scoped, tag = 'scoped memory for tpu_custom_call.1']
    #allocation4 [shape = 's32[2]{0}', space=sflag, size = 0x8, scoped, tag = 'scoped memory for tpu_custom_call.1']
    #allocation5 [shape = 'u8[8192]{0}', space=vmem, size = 0x2000, scoped, tag = 'input window, operand 1']
    #allocation6 [shape = 's32[2]{0}', space=sflag, size = 0x8, scoped, tag = 'scoped memory for tpu_custom_call.1']
    #allocation7 [shape = 'u8[8192]{0}', space=vmem, size = 0x2000, scoped, tag = 'output window, operand 0']
    %7 = vsyncpa [#allocation3], 0
    %s8 = scalar_lea.sflag [#allocation3], 1
    %9 = vsyncpa %s8, 0
    %10 = vsyncpa [#allocation6], 0
    %s11 = scalar_lea.sflag [#allocation6], 1
    %12 = vsyncpa %s11, 0
    %13 = vsyncpa [#allocation4], 0
    %s14 = scalar_lea.sflag [#allocation4], 1
    %15 = vsyncpa %s14, 0
    loop: start=0, step=1, limit=6
    $region2: #{tpu_custom_call.1} parent=1 // loop_pre_header
      _
    $region3: #{tpu_custom_call.1} parent=1 // loop_header
      %s17 = sphi 0, %s21
      %p18 = scmp.ge.s32.totalorder %s17, 6
      %s24 = sphi 0, %s36
      %s25 = sphi 0, %s32
      %s26 = sphi 0, %s24
      %s27 = sphi 0, %s25
      %s28 = sphi 0, %s26
      %s29 = sphi 0, %s27
      %s41 = sphi 0, %s43
      %s44 = sphi 0, %s41
      %s45 = sphi 0, %s44
      %s61 = sphi 0, %s45
      %s67 = sphi 0, %s69
      %s70 = sphi 0, %s67
      %s71 = sphi 0, %s70
      %s87 = sphi 0, %s71
      %s95 = sphi 0, %s97
      %s98 = sphi 0, %s95
      %s99 = sphi 0, %s98
      %s115 = sphi 0, %s99
    $region4: #{tpu_custom_call.1} parent=1 // loop_header_branch
      %20 = sbr.rel (%p18) target = $region8
    $region5: #{tpu_custom_call.1} parent=1 // loop_body
      %s22 = ssub.s32 %s17, 1
      %s23 = ssub.s32 %s17, 2
      %s30 = sadd.s32 1, %s25
      %p31 = scmp.ge.s32.totalorder %s30, 1
      %s32 = scalar_select %p31, 0, %s30
      %s33 = sadd.s32 1, %s24
      %s34 = scalar_select %p31, %s33, %s24
      %p35 = scmp.ge.s32.totalorder %s34, 4
      %s36 = scalar_select %p35, 0, %s34
      %s37 = ssub.s32 %s24, %s36
      %s38 = ssub.s32 %s25, %s32
      %s39 = sor.u32 %s37, %s38
      %p40 = scmp.eq.s32.totalorder %s39, 0
      %s42 = sadd.s32 %s41, 1
      %s43 = scalar_select %p40, %s41, %s42
      %p46 = pneg %p40
      %p47 = scmp.eq.s32.totalorder %s17, 3
      %p48 = por %p46, %p47
      %p49 = scmp.ne.s32.totalorder %s41, %s44
      %p50 = scmp.eq.s32.totalorder %s17, 0
      %p51 = por %p49, %p50
      %p52 = scmp.ne.s32.totalorder %s41, %s44
      %p53 = scmp.eq.s32.totalorder %s22, 3
      %p54 = por %p52, %p53
      %p55 = scmp.ne.s32.totalorder %s44, %s45
      %p56 = scmp.eq.s32.totalorder %s22, 0
      %p57 = por %p55, %p56
      %p58 = scmp.ne.s32.totalorder %s44, %s45
      %p59 = scmp.eq.s32.totalorder %s23, 3
      %p60 = por %p58, %p59
      %p62 = scmp.ne.s32.totalorder %s45, %s61
      %p63 = scmp.eq.s32.totalorder %s23, 0
      %p64 = por %p62, %p63
      %s65 = ssub.s32 %s24, %s36
      %p66 = scmp.eq.s32.totalorder %s65, 0
      %s68 = sadd.s32 %s67, 1
      %s69 = scalar_select %p66, %s67, %s68
      %p72 = pneg %p66
      %p73 = scmp.eq.s32.totalorder %s17, 3
      %p74 = por %p72, %p73
      %p75 = scmp.ne.s32.totalorder %s67, %s70
      %p76 = scmp.eq.s32.totalorder %s17, 0
      %p77 = por %p75, %p76
      %p78 = scmp.ne.s32.totalorder %s67, %s70
      %p79 = scmp.eq.s32.totalorder %s22, 3
      %p80 = por %p78, %p79
      %p81 = scmp.ne.s32.totalorder %s70, %s71
      %p82 = scmp.eq.s32.totalorder %s22, 0
      %p83 = por %p81, %p82
      %p84 = scmp.ne.s32.totalorder %s70, %s71
      %p85 = scmp.eq.s32.totalorder %s23, 3
      %p86 = por %p84, %p85
      %p88 = scmp.ne.s32.totalorder %s71, %s87
      %p89 = scmp.eq.s32.totalorder %s23, 0
      %p90 = por %p88, %p89
      %s91 = ssub.s32 %s24, %s36
      %s92 = ssub.s32 %s25, %s32
      %s93 = sor.u32 %s91, %s92
      %p94 = scmp.eq.s32.totalorder %s93, 0
      %s96 = sadd.s32 %s95, 1
      %s97 = scalar_select %p94, %s95, %s96
      %p100 = pneg %p94
      %p101 = scmp.eq.s32.totalorder %s17, 3
      %p102 = por %p100, %p101
      %p103 = scmp.ne.s32.totalorder %s95, %s98
      %p104 = scmp.eq.s32.totalorder %s17, 0
      %p105 = por %p103, %p104
      %p106 = scmp.ne.s32.totalorder %s95, %s98
      %p107 = scmp.eq.s32.totalorder %s22, 3
      %p108 = por %p106, %p107
      %p109 = scmp.ne.s32.totalorder %s98, %s99
      %p110 = scmp.eq.s32.totalorder %s22, 0
      %p111 = por %p109, %p110
      %p112 = scmp.ne.s32.totalorder %s98, %s99
      %p113 = scmp.eq.s32.totalorder %s23, 3
      %p114 = por %p112, %p113
      %p116 = scmp.ne.s32.totalorder %s99, %s115
      %p117 = scmp.eq.s32.totalorder %s23, 0
      %p118 = por %p116, %p117
      %p119 = scmp.le.s32.totalorder 1, %s17
      %p120 = scmp.lt.s32.totalorder %s17, 5
      %p121 = pnand %p119, %p120
      %p122 = pneg %p121
      // Predicated region
      $region9: #{tpu_custom_call.1} parent=5 // pred_check
        _
      $region10: #{tpu_custom_call.1} parent=5 // pred_check_branch
        %124 = sbr.rel (%p121) target = $region12
      $region11: #{tpu_custom_call.1} parent=5 // pred_region
        %s125 = ssub.s32 %s17, 1
      $region12: #{tpu_custom_call.1} parent=5 // pred_fallthru
        _
      %p126 = scmp.lt.s32.totalorder %s17, 4
      // Predicated region
      $region13: #{tpu_custom_call.1} parent=5 // pred_check
        %p127 = pneg %p126
      $region14: #{tpu_custom_call.1} parent=5 // pred_check_branch
        %129 = sbr.rel (%p127) target = $region16
      $region15: #{tpu_custom_call.1} parent=5 // pred_region
        // Predicated region
        $region17: #{tpu_custom_call.1} parent=15 // pred_check
          %p130 = pneg %p51
        $region18: #{tpu_custom_call.1} parent=15 // pred_check_branch
          %132 = sbr.rel (%p130) target = $region20
        $region19: #{tpu_custom_call.1} parent=15 // pred_region
          %s133 = sand.u32 %s41, 1
          %s134 = scalar_lea.sflag [#allocation3], %s133
          %s135 = sand.u32 %s41, 1
          %s136 = smul.addr %s135, 4
          %s137 = scalar_lea.vmem [#allocation2], %s136
          %s138 = smul.u32 2, %s25
          %s140 = ssub.s32 64, 64
          %141 = vsyncadd %s134, %s140
          %s142 = smul.addr %s24, 2
          %s143 = sadd.s32 %s138, %s142
          %s144 = smul.addr %s143, 32
          %s145 = scalar_lea.hbm %s0, %s144
          %s147 = sshll.u32 %s137, 4
          %s148 = int_to_ptr.vmem [resolvable:$true] %s147
          %150 = dma.hbm_to_vmem [thread:$0]  %s145, 64, %s148, %s134
        $region20: #{tpu_custom_call.1} parent=15 // pred_fallthru
          _
        // Predicated region
        $region21: #{tpu_custom_call.1} parent=15 // pred_check
          %p151 = pneg %p77
        $region22: #{tpu_custom_call.1} parent=15 // pred_check_branch
          %153 = sbr.rel (%p151) target = $region24
        $region23: #{tpu_custom_call.1} parent=15 // pred_region
          %s154 = sand.u32 %s67, 1
          %s155 = scalar_lea.sflag [#allocation6], %s154
          %s156 = sand.u32 %s67, 1
          %s157 = smul.addr %s156, 8
          %s158 = scalar_lea.vmem [#allocation5], %s157
          %s160 = ssub.s32 128, 128
          %161 = vsyncadd %s155, %s160
          %s162 = smul.addr %s24, 2
          %s163 = smul.addr %s162, 64
          %s164 = scalar_lea.hbm %s1, %s163
          %s166 = sshll.u32 %s158, 4
          %s167 = int_to_ptr.vmem [resolvable:$true] %s166
          %169 = dma.hbm_to_vmem [thread:$0]  %s164, 128, %s167, %s155
        $region24: #{tpu_custom_call.1} parent=15 // pred_fallthru
          _
      $region16: #{tpu_custom_call.1} parent=5 // pred_fallthru
        _
      %p170 = scmp.le.s32.totalorder 1, %s17
      %p171 = scmp.lt.s32.totalorder %s17, 5
      %p172 = pnand %p170, %p171
      %p173 = pneg %p172
      // Predicated region
      $region25: #{tpu_custom_call.1} parent=5 // pred_check
        _
      $region26: #{tpu_custom_call.1} parent=5 // pred_check_branch
        %175 = sbr.rel (%p172) target = $region28
      $region27: #{tpu_custom_call.1} parent=5 // pred_region
        %s176 = ssub.s32 %s17, 1
        %s177 = sand.u32 %s44, 1
        %s178 = scalar_lea.sflag [#allocation3], %s177
        %s179 = sand.u32 %s44, 1
        %s180 = smul.addr %s179, 4
        %s181 = scalar_lea.vmem [#allocation2], %s180
        // Predicated region
        $region29: #{tpu_custom_call.1} parent=27 // pred_check
          %p182 = pneg %p57
        $region30: #{tpu_custom_call.1} parent=27 // pred_check_branch
          %184 = sbr.rel (%p182) target = $region32
        $region31: #{tpu_custom_call.1} parent=27 // pred_region
          %185 = dma.done %s178, 64
        $region32: #{tpu_custom_call.1} parent=27 // pred_fallthru
          _
        %s186 = sand.u32 %s70, 1
        %s187 = scalar_lea.sflag [#allocation6], %s186
        %s188 = sand.u32 %s70, 1
        %s189 = smul.addr %s188, 8
        %s190 = scalar_lea.vmem [#allocation5], %s189
        // Predicated region
        $region33: #{tpu_custom_call.1} parent=27 // pred_check
          %p191 = pneg %p83
        $region34: #{tpu_custom_call.1} parent=27 // pred_check_branch
          %193 = sbr.rel (%p191) target = $region36
        $region35: #{tpu_custom_call.1} parent=27 // pred_region
          %194 = dma.done %s187, 128
        $region36: #{tpu_custom_call.1} parent=27 // pred_fallthru
          _
        %s195 = sand.u32 %s44, 1
        %s196 = scalar_lea.sflag [#allocation3], %s195
        %s197 = sand.u32 %s44, 1
        %s198 = smul.addr %s197, 4
        %s199 = scalar_lea.vmem [#allocation2], %s198
        %p200 = pneg %p57
        %p201 = pneg %p54
        %s202 = sand.u32 %s70, 1
        %s203 = scalar_lea.sflag [#allocation6], %s202
        %s204 = sand.u32 %s70, 1
        %s205 = smul.addr %s204, 8
        %s206 = scalar_lea.vmem [#allocation5], %s205
        %p207 = pneg %p83
        %p208 = pneg %p80
        %p209 = pneg %p111
        %p210 = pneg %p108
        %s211 = sand.u32 %s98, 1
        %s212 = scalar_lea.sflag [#allocation4], %s211
        %s213 = sand.u32 %s98, 1
        %s214 = smul.addr %s213, 8
        %s215 = scalar_lea.vmem [#allocation7], %s214
        %s216 = smul.u32 2, %s27
        %s217 = smul.u32 2, %s27
        %v218 = vld [vmem:[%s190] sm:$0xff]
        %v219 = vld [vmem:[%s181] sm:$0xf]
        %v220 = vadd.f32 %v219, 1.0
        %v221 = vmul.f32 %v220, 7.5
        %v222 = vfloor.f32 %v221
        %v223 = vsub.f32 %v221, %v222
        %v224 = vsub.f32 1.0, %v223
        %v225 = vcvt.f32.s32.to.zero.pseudo %v222
        %v226 = vadd.s32 %v225, 1
        %v227 = vlaneseq
        %v228 = vshrl.u32 %v227, 7
        %v229 = vadd.s32 %v228, 8
        %v230 = vlaneseq
        %v231 = vshrl.u32 %v230, 7
        %v232 = vsub.s32 0, %v231
        %v233 = vrot.slane %v225, %v232
        %v234 = vlaneseq
        %v235 = vshrl.u32 %v234, 7
        %v236 = vsub.s32 2, %v235
        %v237 = vrot.slane %v225, %v236
        %v238 = vlaneseq
        %v239 = vshrl.u32 %v238, 7
        %v240 = vsub.s32 0, %v239
        %v241 = vrot.slane %v233, %v240
        %v242 = vlaneseq
        %v243 = vshrl.u32 %v242, 7
        %v244 = vsub.s32 0, %v243
        %v245 = vrot.slane %v237, %v244
        %vm246 = vcmp.eq.s32.totalorder %v228, %v241
        %vm247 = vcmp.eq.s32.totalorder %v228, %v245
        %vm248 = vcmp.eq.s32.totalorder %v229, %v241
        %vm249 = vcmp.eq.s32.totalorder %v229, %v245
        %v251 = vlaneseq
        %v252 = vshrl.u32 %v251, 7
        %v253 = vsub.s32 0, %v252
        %v254 = vrot.slane %v224, %v253
        %v255 = vlaneseq
        %v256 = vshrl.u32 %v255, 7
        %v257 = vsub.s32 2, %v256
        %v258 = vrot.slane %v224, %v257
        %v261 = vlaneseq
        %v262 = vshrl.u32 %v261, 7
        %v263 = vsub.s32 0, %v262
        %v264 = vrot.slane %v254, %v263
        %v265 = vlaneseq
        %v266 = vshrl.u32 %v265, 7
        %v267 = vsub.s32 0, %v266
        %v268 = vrot.slane %v258, %v267
        %v269 = vsel %vm246, %v264, 0.0
        %v270 = vsel %vm247, %v268, 0.0
        %v271 = vsel %vm248, %v264, 0.0
        %v272 = vsel %vm249, %v268, 0.0
        %v273 = vlaneseq
        %v274 = vshrl.u32 %v273, 7
        %v275 = vsub.s32 0, %v274
        %v276 = vrot.slane %v226, %v275
        %v277 = vlaneseq
        %v278 = vshrl.u32 %v277, 7
        %v279 = vsub.s32 2, %v278
        %v280 = vrot.slane %v226, %v279
        %v281 = vlaneseq
        %v282 = vshrl.u32 %v281, 7
        %v283 = vsub.s32 0, %v282
        %v284 = vrot.slane %v276, %v283
        %v285 = vlaneseq
        %v286 = vshrl.u32 %v285, 7
        %v287 = vsub.s32 0, %v286
        %v288 = vrot.slane %v280, %v287
        %vm289 = vcmp.eq.s32.totalorder %v228, %v284
        %vm290 = vcmp.eq.s32.totalorder %v228, %v288
        %vm291 = vcmp.eq.s32.totalorder %v229, %v284
        %vm292 = vcmp.eq.s32.totalorder %v229, %v288
        %v294 = vlaneseq
        %v295 = vshrl.u32 %v294, 7
        %v296 = vsub.s32 0, %v295
        %v297 = vrot.slane %v223, %v296
        %v298 = vlaneseq
        %v299 = vshrl.u32 %v298, 7
        %v300 = vsub.s32 2, %v299
        %v301 = vrot.slane %v223, %v300
        %v304 = vlaneseq
        %v305 = vshrl.u32 %v304, 7
        %v306 = vsub.s32 0, %v305
        %v307 = vrot.slane %v297, %v306
        %v308 = vlaneseq
        %v309 = vshrl.u32 %v308, 7
        %v310 = vsub.s32 0, %v309
        %v311 = vrot.slane %v301, %v310
        %v312 = vsel %vm289, %v307, 0.0
        %v313 = vsel %vm290, %v311, 0.0
        %v314 = vsel %vm291, %v307, 0.0
        %v315 = vsel %vm292, %v311, 0.0
        %v316 = vadd.f32 %v269, %v312
        %v317 = vadd.f32 %v270, %v313
        %v318 = vadd.f32 %v271, %v314
        %v319 = vadd.f32 %v272, %v315
        %v320 = vlaneseq
        %v321 = vshrl.u32 %v320, 7
        %v322 = vsub.s32 1, %v321
        %v323 = vrot.slane %v225, %v322
        %v324 = vlaneseq
        %v325 = vshrl.u32 %v324, 7
        %v326 = vsub.s32 3, %v325
        %v327 = vrot.slane %v225, %v326
        %v328 = vlaneseq
        %v329 = vshrl.u32 %v328, 7
        %v330 = vsub.s32 1, %v329
        %v331 = vrot.slane %v323, %v330
        %v332 = vlaneseq
        %v333 = vshrl.u32 %v332, 7
        %v334 = vsub.s32 1, %v333
        %v335 = vrot.slane %v327, %v334
        %vm336 = vcmp.eq.s32.totalorder %v228, %v331
        %vm337 = vcmp.eq.s32.totalorder %v228, %v335
        %vm338 = vcmp.eq.s32.totalorder %v229, %v331
        %vm339 = vcmp.eq.s32.totalorder %v229, %v335
        %v340 = vlaneseq
        %v341 = vshrl.u32 %v340, 7
        %v342 = vsub.s32 1, %v341
        %v343 = vrot.slane %v224, %v342
        %v344 = vlaneseq
        %v345 = vshrl.u32 %v344, 7
        %v346 = vsub.s32 3, %v345
        %v347 = vrot.slane %v224, %v346
        %v350 = vlaneseq
        %v351 = vshrl.u32 %v350, 7
        %v352 = vsub.s32 1, %v351
        %v353 = vrot.slane %v343, %v352
        %v354 = vlaneseq
        %v355 = vshrl.u32 %v354, 7
        %v356 = vsub.s32 1, %v355
        %v357 = vrot.slane %v347, %v356
        %v358 = vsel %vm336, %v353, 0.0
        %v359 = vsel %vm337, %v357, 0.0
        %v360 = vsel %vm338, %v353, 0.0
        %v361 = vsel %vm339, %v357, 0.0
        %v362 = vlaneseq
        %v363 = vshrl.u32 %v362, 7
        %v364 = vsub.s32 1, %v363
        %v365 = vrot.slane %v226, %v364
        %v366 = vlaneseq
        %v367 = vshrl.u32 %v366, 7
        %v368 = vsub.s32 3, %v367
        %v369 = vrot.slane %v226, %v368
        %v370 = vlaneseq
        %v371 = vshrl.u32 %v370, 7
        %v372 = vsub.s32 1, %v371
        %v373 = vrot.slane %v365, %v372
        %v374 = vlaneseq
        %v375 = vshrl.u32 %v374, 7
        %v376 = vsub.s32 1, %v375
        %v377 = vrot.slane %v369, %v376
        %vm378 = vcmp.eq.s32.totalorder %v228, %v373
        %vm379 = vcmp.eq.s32.totalorder %v228, %v377
        %vm380 = vcmp.eq.s32.totalorder %v229, %v373
        %vm381 = vcmp.eq.s32.totalorder %v229, %v377
        %v382 = vlaneseq
        %v383 = vshrl.u32 %v382, 7
        %v384 = vsub.s32 1, %v383
        %v385 = vrot.slane %v223, %v384
        %v386 = vlaneseq
        %v387 = vshrl.u32 %v386, 7
        %v388 = vsub.s32 3, %v387
        %v389 = vrot.slane %v223, %v388
        %v392 = vlaneseq
        %v393 = vshrl.u32 %v392, 7
        %v394 = vsub.s32 1, %v393
        %v395 = vrot.slane %v385, %v394
        %v396 = vlaneseq
        %v397 = vshrl.u32 %v396, 7
        %v398 = vsub.s32 1, %v397
        %v399 = vrot.slane %v389, %v398
        %v400 = vsel %vm378, %v395, 0.0
        %v401 = vsel %vm379, %v399, 0.0
        %v402 = vsel %vm380, %v395, 0.0
        %v403 = vsel %vm381, %v399, 0.0
        %v404 = vadd.f32 %v358, %v400
        %v405 = vadd.f32 %v359, %v401
        %v406 = vadd.f32 %v360, %v402
        %v407 = vadd.f32 %v361, %v403
        %v412 = vcombine.low %v404, %v405
        %v413 = vcombine.high %v404, %v405
        %v415 = vunpack.c.l.s4 1966171168
        %v416 = vunpack.c.0.s8 %v415
        %v417 = vlaneseq
        %v418 = vshrl.u32 %v417, 7
        %v419 = vsub.s32 %v416, %v418
        %v420 = vrot.slane %v412, %v419
        %v422 = vunpack.c.l.s4 1966171168
        %v423 = vunpack.c.0.s8 %v422
        %v424 = vlaneseq
        %v425 = vshrl.u32 %v424, 7
        %v426 = vsub.s32 %v423, %v425
        %v427 = vrot.slane %v413, %v426
        %v428 = vcombine.high %v420, %v420
        %v429 = vcombine.high %v427, %v427
        %v431 = vunpack.c.l.s4 1966171168
        %v432 = vunpack.c.0.s8 %v431
        %v433 = vlaneseq
        %v434 = vshrl.u32 %v433, 7
        %v435 = vsub.s32 %v432, %v434
        %v436 = vrot.slane %v420, %v435
        %v438 = vunpack.c.l.s4 1966171168
        %v439 = vunpack.c.0.s8 %v438
        %v440 = vlaneseq
        %v441 = vshrl.u32 %v440, 7
        %v442 = vsub.s32 %v439, %v441
        %v443 = vrot.slane %v427, %v442
        %v445 = vunpack.c.l.s4 1966171168
        %v446 = vunpack.c.0.s8 %v445
        %v447 = vlaneseq
        %v448 = vshrl.u32 %v447, 7
        %v449 = vsub.s32 %v446, %v448
        %v450 = vrot.slane %v428, %v449
        %v452 = vunpack.c.l.s4 1966171168
        %v453 = vunpack.c.0.s8 %v452
        %v454 = vlaneseq
        %v455 = vshrl.u32 %v454, 7
        %v456 = vsub.s32 %v453, %v455
        %v457 = vrot.slane %v429, %v456
        %v458 = vcombine.high %v436, %v436
        %v459 = vcombine.high %v443, %v443
        %v460 = vcombine.high %v450, %v450
        %v461 = vcombine.high %v457, %v457
        %v462 = vcombine.low %v406, %v407
        %v463 = vcombine.high %v406, %v407
        %v465 = vunpack.c.l.s4 1966171168
        %v466 = vunpack.c.0.s8 %v465
        %v467 = vlaneseq
        %v468 = vshrl.u32 %v467, 7
        %v469 = vsub.s32 %v466, %v468
        %v470 = vrot.slane %v462, %v469
        %v472 = vunpack.c.l.s4 1966171168
        %v473 = vunpack.c.0.s8 %v472
        %v474 = vlaneseq
        %v475 = vshrl.u32 %v474, 7
        %v476 = vsub.s32 %v473, %v475
        %v477 = vrot.slane %v463, %v476
        %v478 = vcombine.high %v470, %v470
        %v479 = vcombine.high %v477, %v477
        %v481 = vunpack.c.l.s4 1966171168
        %v482 = vunpack.c.0.s8 %v481
        %v483 = vlaneseq
        %v484 = vshrl.u32 %v483, 7
        %v485 = vsub.s32 %v482, %v484
        %v486 = vrot.slane %v470, %v485
        %v488 = vunpack.c.l.s4 1966171168
        %v489 = vunpack.c.0.s8 %v488
        %v490 = vlaneseq
        %v491 = vshrl.u32 %v490, 7
        %v492 = vsub.s32 %v489, %v491
        %v493 = vrot.slane %v477, %v492
        %v495 = vunpack.c.l.s4 1966171168
        %v496 = vunpack.c.0.s8 %v495
        %v497 = vlaneseq
        %v498 = vshrl.u32 %v497, 7
        %v499 = vsub.s32 %v496, %v498
        %v500 = vrot.slane %v478, %v499
        %v502 = vunpack.c.l.s4 1966171168
        %v503 = vunpack.c.0.s8 %v502
        %v504 = vlaneseq
        %v505 = vshrl.u32 %v504, 7
        %v506 = vsub.s32 %v503, %v505
        %v507 = vrot.slane %v479, %v506
        %v508 = vcombine.high %v486, %v486
        %v509 = vcombine.high %v493, %v493
        %v510 = vcombine.high %v500, %v500
        %v511 = vcombine.high %v507, %v507
        %v512 = vlaneseq
        %v513 = vshrl.u32 %v512, 7
        %v514 = vsub.s32 0, %v513
        %v515 = vrot.slane %v436, %v514
        %v516 = vlaneseq
        %v517 = vshrl.u32 %v516, 7
        %v518 = vsub.s32 1, %v517
        %v519 = vrot.slane %v436, %v518
        %v520 = vlaneseq
        %v521 = vshrl.u32 %v520, 7
        %v522 = vsub.s32 0, %v521
        %v523 = vrot.slane %v450, %v522
        %v524 = vlaneseq
        %v525 = vshrl.u32 %v524, 7
        %v526 = vsub.s32 1, %v525
        %v527 = vrot.slane %v450, %v526
        %v528 = vlaneseq
        %v529 = vshrl.u32 %v528, 7
        %v530 = vsub.s32 0, %v529
        %v531 = vrot.slane %v458, %v530
        %v532 = vlaneseq
        %v533 = vshrl.u32 %v532, 7
        %v534 = vsub.s32 1, %v533
        %v535 = vrot.slane %v458, %v534
        %v536 = vlaneseq
        %v537 = vshrl.u32 %v536, 7
        %v538 = vsub.s32 0, %v537
        %v539 = vrot.slane %v460, %v538
        %v540 = vlaneseq
        %v541 = vshrl.u32 %v540, 7
        %v542 = vsub.s32 1, %v541
        %v543 = vrot.slane %v460, %v542
        %v544 = vlaneseq
        %v545 = vshrl.u32 %v544, 7
        %v546 = vsub.s32 0, %v545
        %v547 = vrot.slane %v443, %v546
        %v548 = vlaneseq
        %v549 = vshrl.u32 %v548, 7
        %v550 = vsub.s32 1, %v549
        %v551 = vrot.slane %v443, %v550
        %v552 = vlaneseq
        %v553 = vshrl.u32 %v552, 7
        %v554 = vsub.s32 0, %v553
        %v555 = vrot.slane %v457, %v554
        %v556 = vlaneseq
        %v557 = vshrl.u32 %v556, 7
        %v558 = vsub.s32 1, %v557
        %v559 = vrot.slane %v457, %v558
        %v560 = vlaneseq
        %v561 = vshrl.u32 %v560, 7
        %v562 = vsub.s32 0, %v561
        %v563 = vrot.slane %v459, %v562
        %v564 = vlaneseq
        %v565 = vshrl.u32 %v564, 7
        %v566 = vsub.s32 1, %v565
        %v567 = vrot.slane %v459, %v566
        %v568 = vlaneseq
        %v569 = vshrl.u32 %v568, 7
        %v570 = vsub.s32 0, %v569
        %v571 = vrot.slane %v461, %v570
        %v572 = vlaneseq
        %v573 = vshrl.u32 %v572, 7
        %v574 = vsub.s32 1, %v573
        %v575 = vrot.slane %v461, %v574
        %v576 = vlaneseq
        %v577 = vshrl.u32 %v576, 7
        %v578 = vsub.s32 0, %v577
        %v579 = vrot.slane %v486, %v578
        %v580 = vlaneseq
        %v581 = vshrl.u32 %v580, 7
        %v582 = vsub.s32 1, %v581
        %v583 = vrot.slane %v486, %v582
        %v584 = vlaneseq
        %v585 = vshrl.u32 %v584, 7
        %v586 = vsub.s32 0, %v585
        %v587 = vrot.slane %v500, %v586
        %v588 = vlaneseq
        %v589 = vshrl.u32 %v588, 7
        %v590 = vsub.s32 1, %v589
        %v591 = vrot.slane %v500, %v590
        %v592 = vlaneseq
        %v593 = vshrl.u32 %v592, 7
        %v594 = vsub.s32 0, %v593
        %v595 = vrot.slane %v508, %v594
        %v596 = vlaneseq
        %v597 = vshrl.u32 %v596, 7
        %v598 = vsub.s32 1, %v597
        %v599 = vrot.slane %v508, %v598
        %v600 = vlaneseq
        %v601 = vshrl.u32 %v600, 7
        %v602 = vsub.s32 0, %v601
        %v603 = vrot.slane %v510, %v602
        %v604 = vlaneseq
        %v605 = vshrl.u32 %v604, 7
        %v606 = vsub.s32 1, %v605
        %v607 = vrot.slane %v510, %v606
        %v608 = vlaneseq
        %v609 = vshrl.u32 %v608, 7
        %v610 = vsub.s32 0, %v609
        %v611 = vrot.slane %v493, %v610
        %v612 = vlaneseq
        %v613 = vshrl.u32 %v612, 7
        %v614 = vsub.s32 1, %v613
        %v615 = vrot.slane %v493, %v614
        %v616 = vlaneseq
        %v617 = vshrl.u32 %v616, 7
        %v618 = vsub.s32 0, %v617
        %v619 = vrot.slane %v507, %v618
        %v620 = vlaneseq
        %v621 = vshrl.u32 %v620, 7
        %v622 = vsub.s32 1, %v621
        %v623 = vrot.slane %v507, %v622
        %v624 = vlaneseq
        %v625 = vshrl.u32 %v624, 7
        %v626 = vsub.s32 0, %v625
        %v627 = vrot.slane %v509, %v626
        %v628 = vlaneseq
        %v629 = vshrl.u32 %v628, 7
        %v630 = vsub.s32 1, %v629
        %v631 = vrot.slane %v509, %v630
        %v632 = vlaneseq
        %v633 = vshrl.u32 %v632, 7
        %v634 = vsub.s32 0, %v633
        %v635 = vrot.slane %v511, %v634
        %v636 = vlaneseq
        %v637 = vshrl.u32 %v636, 7
        %v638 = vsub.s32 1, %v637
        %v639 = vrot.slane %v511, %v638
        %v672 = vmul.f32 %v515, %v316
        %v673 = vmul.f32 %v519, %v317
        %v674 = vmul.f32 %v515, %v318
        %v675 = vmul.f32 %v519, %v319
        %v676 = vmul.f32 %v523, %v316
        %v677 = vmul.f32 %v527, %v317
        %v678 = vmul.f32 %v523, %v318
        %v679 = vmul.f32 %v527, %v319
        %v680 = vmul.f32 %v531, %v316
        %v681 = vmul.f32 %v535, %v317
        %v682 = vmul.f32 %v531, %v318
        %v683 = vmul.f32 %v535, %v319
        %v684 = vmul.f32 %v539, %v316
        %v685 = vmul.f32 %v543, %v317
        %v686 = vmul.f32 %v539, %v318
        %v687 = vmul.f32 %v543, %v319
        %v688 = vmul.f32 %v547, %v316
        %v689 = vmul.f32 %v551, %v317
        %v690 = vmul.f32 %v547, %v318
        %v691 = vmul.f32 %v551, %v319
        %v692 = vmul.f32 %v555, %v316
        %v693 = vmul.f32 %v559, %v317
        %v694 = vmul.f32 %v555, %v318
        %v695 = vmul.f32 %v559, %v319
        %v696 = vmul.f32 %v563, %v316
        %v697 = vmul.f32 %v567, %v317
        %v698 = vmul.f32 %v563, %v318
        %v699 = vmul.f32 %v567, %v319
        %v700 = vmul.f32 %v571, %v316
        %v701 = vmul.f32 %v575, %v317
        %v702 = vmul.f32 %v571, %v318
        %v703 = vmul.f32 %v575, %v319
        %v704 = vmul.f32 %v579, %v316
        %v705 = vmul.f32 %v583, %v317
        %v706 = vmul.f32 %v579, %v318
        %v707 = vmul.f32 %v583, %v319
        %v708 = vmul.f32 %v587, %v316
        %v709 = vmul.f32 %v591, %v317
        %v710 = vmul.f32 %v587, %v318
        %v711 = vmul.f32 %v591, %v319
        %v712 = vmul.f32 %v595, %v316
        %v713 = vmul.f32 %v599, %v317
        %v714 = vmul.f32 %v595, %v318
        %v715 = vmul.f32 %v599, %v319
        %v716 = vmul.f32 %v603, %v316
        %v717 = vmul.f32 %v607, %v317
        %v718 = vmul.f32 %v603, %v318
        %v719 = vmul.f32 %v607, %v319
        %v720 = vmul.f32 %v611, %v316
        %v721 = vmul.f32 %v615, %v317
        %v722 = vmul.f32 %v611, %v318
        %v723 = vmul.f32 %v615, %v319
        %v724 = vmul.f32 %v619, %v316
        %v725 = vmul.f32 %v623, %v317
        %v726 = vmul.f32 %v619, %v318
        %v727 = vmul.f32 %v623, %v319
        %v728 = vmul.f32 %v627, %v316
        %v729 = vmul.f32 %v631, %v317
        %v730 = vmul.f32 %v627, %v318
        %v731 = vmul.f32 %v631, %v319
        %v732 = vmul.f32 %v635, %v316
        %v733 = vmul.f32 %v639, %v317
        %v734 = vmul.f32 %v635, %v318
        %v735 = vmul.f32 %v639, %v319
        %v737 = vcombine.high %v218, %v218
        %739 = vmatprep.subr.mxu0 %v673
        %740 = vmatpush1.msra.mxu0 %v672
        %741 = vmatprep.subr.mxu0 %v675
        %742 = vmatpush1.msra.mxu0 %v674
        %743 = vmatprep.subr.mxu0 %v677
        %744 = vmatpush1.msra.mxu0 %v676
        %745 = vmatprep.subr.mxu0 %v679
        %746 = vmatpush1.msra.mxu0 %v678
        %747 = vmatprep.subr.mxu0 %v681
        %748 = vmatpush1.msra.mxu0 %v680
        %749 = vmatprep.subr.mxu0 %v683
        %750 = vmatpush1.msra.mxu0 %v682
        %751 = vmatprep.subr.mxu0 %v685
        %752 = vmatpush1.msra.mxu0 %v684
        %753 = vmatprep.subr.mxu0 %v687
        %754 = vmatpush1.msra.mxu0 %v686
        %755 = vmatprep.subr.mxu0 %v689
        %756 = vmatpush1.msra.mxu0 %v688
        %757 = vmatprep.subr.mxu0 %v691
        %758 = vmatpush1.msra.mxu0 %v690
        %759 = vmatprep.subr.mxu0 %v693
        %760 = vmatpush1.msra.mxu0 %v692
        %761 = vmatprep.subr.mxu0 %v695
        %762 = vmatpush1.msra.mxu0 %v694
        %763 = vmatprep.subr.mxu0 %v697
        %764 = vmatpush1.msra.mxu0 %v696
        %765 = vmatprep.subr.mxu0 %v699
        %766 = vmatpush1.msra.mxu0 %v698
        %767 = vmatprep.subr.mxu0 %v701
        %768 = vmatpush1.msra.mxu0 %v700
        %769 = vmatprep.subr.mxu0 %v703
        %770 = vmatpush1.msra.mxu0 %v702
        %771 = vmatprep.subr.mxu0 %v705
        %772 = vmatpush1.msra.mxu0 %v704
        %773 = vmatprep.subr.mxu0 %v707
        %774 = vmatpush1.msra.mxu0 %v706
        %775 = vmatprep.subr.mxu0 %v709
        %776 = vmatpush1.msra.mxu0 %v708
        %777 = vmatprep.subr.mxu0 %v711
        %778 = vmatpush1.msra.mxu0 %v710
        %779 = vmatprep.subr.mxu0 %v713
        %780 = vmatpush1.msra.mxu0 %v712
        %781 = vmatprep.subr.mxu0 %v715
        %782 = vmatpush1.msra.mxu0 %v714
        %783 = vmatprep.subr.mxu0 %v717
        %784 = vmatpush1.msra.mxu0 %v716
        %785 = vmatprep.subr.mxu0 %v719
        %786 = vmatpush1.msra.mxu0 %v718
        %787 = vmatprep.subr.mxu0 %v721
        %788 = vmatpush1.msra.mxu0 %v720
        %789 = vmatprep.subr.mxu0 %v723
        %790 = vmatpush1.msra.mxu0 %v722
        %791 = vmatprep.subr.mxu0 %v725
        %792 = vmatpush1.msra.mxu0 %v724
        %793 = vmatprep.subr.mxu0 %v727
        %794 = vmatpush1.msra.mxu0 %v726
        %795 = vmatprep.subr.mxu0 %v729
        %796 = vmatpush1.msra.mxu0 %v728
        %797 = vmatprep.subr.mxu0 %v731
        %798 = vmatpush1.msra.mxu0 %v730
        %799 = vmatprep.subr.mxu0 %v733
        %800 = vmatpush1.msra.mxu0 %v732
        %801 = vmatprep.subr.mxu0 %v735
        %802 = vmatpush1.msra.mxu0 %v734
        %803 = vmatprep.mubr.f32.mxu0 %v737
        %804 = vmatmul.mubr.f32.gmra.mrb[0].mxu0 %v218
        %v805 = vpop.f32.mrb[0].mxu0
        %v806 = vadd.f32 0.0, %v805
        %v807 = vpop.f32.mrb[0].mxu0
        %v808 = vadd.f32 0.0, %v807
        %809 = vdwg.mxu0
        %v812 = vcombine.low %v806, %v808
        %814 = vst [vmem:[%s215] sm:$0xff] %v812
        %s815 = sand.u32 %s98, 1
        %s816 = scalar_lea.sflag [#allocation4], %s815
        %s817 = sand.u32 %s98, 1
        %s818 = smul.addr %s817, 8
        %s819 = scalar_lea.vmem [#allocation7], %s818
        // Predicated region
        $region37: #{tpu_custom_call.1} parent=27 // pred_check
          %p820 = pneg %p108
        $region38: #{tpu_custom_call.1} parent=27 // pred_check_branch
          %822 = sbr.rel (%p820) target = $region40
        $region39: #{tpu_custom_call.1} parent=27 // pred_region
          %s823 = smul.u32 2, %s27
          %s825 = ssub.s32 128, 128
          %826 = vsyncadd %s816, %s825
          %s827 = smul.addr %s26, 2
          %s828 = sadd.s32 %s823, %s827
          %s829 = smul.addr %s828, 64
          %s830 = scalar_lea.hbm %s2, %s829
          %s832 = sshll.u32 %s819, 4
          %s833 = int_to_ptr.vmem [resolvable:$true] %s832
          %835 = dma.vmem_to_hbm [thread:$0]  %s833, 128, %s830, %s816
        $region40: #{tpu_custom_call.1} parent=27 // pred_fallthru
          _
      $region28: #{tpu_custom_call.1} parent=5 // pred_fallthru
        _
      %p836 = scmp.le.s32.totalorder 2, %s17
      // Predicated region
      $region41: #{tpu_custom_call.1} parent=5 // pred_check
        %p837 = pneg %p836
      $region42: #{tpu_custom_call.1} parent=5 // pred_check_branch
        %839 = sbr.rel (%p837) target = $region44
      $region43: #{tpu_custom_call.1} parent=5 // pred_region
        %s840 = ssub.s32 %s17, 2
        // Predicated region
        $region45: #{tpu_custom_call.1} parent=43 // pred_check
          %p841 = pneg %p114
        $region46: #{tpu_custom_call.1} parent=43 // pred_check_branch
          %843 = sbr.rel (%p841) target = $region48
        $region47: #{tpu_custom_call.1} parent=43 // pred_region
          %s844 = sand.u32 %s99, 1
          %s845 = scalar_lea.sflag [#allocation4], %s844
          %s846 = sand.u32 %s99, 1
          %s847 = smul.addr %s846, 8
          %s848 = scalar_lea.vmem [#allocation7], %s847
          %849 = dma.done %s845, 128
        $region48: #{tpu_custom_call.1} parent=43 // pred_fallthru
          _
      $region44: #{tpu_custom_call.1} parent=5 // pred_fallthru
        _
    $region6: #{tpu_custom_call.1} parent=1 // loop_footer
      %s21 = sadd.s32 1, %s17
    $region7: #{tpu_custom_call.1} parent=1 // loop_footer_branch
      %16 = sbr.rel target = $region3
    $region8: #{tpu_custom_call.1} parent=1 // loop_exit
      _
    %850 = vsyncpa [#allocation3], 1
    %s851 = scalar_lea.sflag [#allocation3], 1
    %852 = vsyncpa %s851, 1
    %853 = vsyncpa [#allocation6], 1
    %s854 = scalar_lea.sflag [#allocation6], 1
    %855 = vsyncpa %s854, 1
    %856 = vsyncpa [#allocation4], 1
    %s857 = scalar_lea.sflag [#allocation4], 1
    %858 = vsyncpa %s857, 1

</llo_original>
